<compile_context>
chip_gen: v6e
topology: v6e:2x2x1
jax: 0.10.0
libtpu: 0.0.40
codegen_flags: <defaults>
</compile_context>

<pallas_src>
import math

import jax
import jax.numpy as jnp
from jax import lax
from jax.experimental import pallas as pl
from jax.experimental.pallas import tpu as pltpu

_NEG_SLOPE = 0.01  # PyTorch F.leaky_relu default negative_slope


def _leaky_relu(x):
    return jnp.where(x >= 0, x, _NEG_SLOPE * x)


def _make_kernel(n_vec, n_clouds):
    """Build a kernel for `n_clouds` (2 or 3) input clouds and `n_vec` output vectors."""

    def kernel(*refs):
        cloud_refs = refs[:n_clouds]
        w_pre_ref, w_post_ref, w_pre2_ref, w_post2_ref, out_ref = refs[n_clouds:]

        w_pre = w_pre_ref[...]     # (E, E)
        w_post = w_post_ref[...]   # (E, E)
        w_pre2 = w_pre2_ref[...]   # (E, E)

        def agg_cloud(e_ref):
            e = e_ref[0].astype(jnp.float32)                       # (N, E)
            h = _leaky_relu(
                jnp.dot(e, w_pre, preferred_element_type=jnp.float32))
            a = jnp.max(h, axis=0, keepdims=True)                  # intra_cloud_agg = max over points
            return _leaky_relu(
                jnp.dot(a, w_post, preferred_element_type=jnp.float32))   # (1, E)

        aggs = [agg_cloud(r) for r in cloud_refs]
        inter = aggs[0]
        for a in aggs[1:]:
            inter = inter + a
        inter = inter * (1.0 / float(n_clouds))                    # inter_cloud_agg = mean
        inter = _leaky_relu(
            jnp.dot(inter, w_pre2, preferred_element_type=jnp.float32))    # (1, E)

        # intersect.repeat(n_vec,1,1) @ post_mats2  ->  out[v] = inter @ W2[v]
        rows = [
            jnp.dot(inter, w_post2_ref[v], preferred_element_type=jnp.float32)
            for v in range(n_vec)
        ]
        out = jnp.concatenate(rows, axis=0)                        # (n_vec, E)

        # Row-wise L2 normalization: x / ||x||  ==  x * rsqrt(sum(x^2))  (mul, not div)
        inv_norm = lax.rsqrt(jnp.sum(out * out, axis=-1, keepdims=True))
        out_ref[...] = (out * inv_norm)[None].astype(out_ref.dtype)

    return kernel


def cloud_intersection_forward(embeds1, embeds2, pre_mats, post_mats,
                               pre_mats2, post_mats2, embeds3=None):
    """Mirror of CloudIntersection.forward.

    embeds*: (B, N, E) point clouds.  Weights: pre_mats/post_mats/pre_mats2 (E, E),
    post_mats2 (n_vec, E, E).  Returns (B, n_vec, E) with unit-norm rows.
    """
    f32 = jnp.float32
    clouds = [jnp.asarray(embeds1, f32), jnp.asarray(embeds2, f32)]
    if embeds3 is not None:
        clouds.append(jnp.asarray(embeds3, f32))
    pre_mats = jnp.asarray(pre_mats, f32)
    post_mats = jnp.asarray(post_mats, f32)
    pre_mats2 = jnp.asarray(pre_mats2, f32)
    post_mats2 = jnp.asarray(post_mats2, f32)

    B, _, E = clouds[0].shape
    n_vec = post_mats2.shape[0]
    n_clouds = len(clouds)

    cloud_specs = [
        pl.BlockSpec((1, c.shape[1], E), lambda b: (b, 0, 0)) for c in clouds
    ]
    weight_specs = [
        pl.BlockSpec((E, E), lambda b: (0, 0)),            # pre_mats  (resident)
        pl.BlockSpec((E, E), lambda b: (0, 0)),            # post_mats (resident)
        pl.BlockSpec((E, E), lambda b: (0, 0)),            # pre_mats2 (resident)
        pl.BlockSpec((n_vec, E, E), lambda b: (0, 0, 0)),  # post_mats2 (resident)
    ]

    n_pts = sum(c.shape[1] for c in clouds)
    flops = 2 * B * E * E * (n_pts + n_clouds + 1 + n_vec)
    bytes_accessed = 4 * (sum(c.size for c in clouds)
                          + 3 * E * E + n_vec * E * E + B * n_vec * E)

    out = pl.pallas_call(
        _make_kernel(n_vec, n_clouds),
        out_shape=jax.ShapeDtypeStruct((B, n_vec, E), f32),
        grid_spec=pltpu.PrefetchScalarGridSpec(
            num_scalar_prefetch=0,
            grid=(B,),
            in_specs=cloud_specs + weight_specs,
            # Per-program output block (lane-dense over E, no shared resident slab),
            # so the batch axis can be fully parallel.
            out_specs=pl.BlockSpec((1, n_vec, E), lambda b: (b, 0, 0)),
        ),
        compiler_params=pltpu.CompilerParams(dimension_semantics=("parallel",)),
        cost_estimate=pl.CostEstimate(
            flops=flops, transcendentals=B * n_vec, bytes_accessed=bytes_accessed),
    )(*clouds, pre_mats, post_mats, pre_mats2, post_mats2)
    return out


def _reference(embeds1, embeds2, pre, post, pre2, post2, embeds3=None):
    """Pure-JAX mirror of the PyTorch module for correctness checking."""
    def lrelu(x):
        return jnp.where(x >= 0, x, _NEG_SLOPE * x)

    e1 = lrelu(jnp.einsum('bne,ef->bnf', embeds1, pre))
    e2 = lrelu(jnp.einsum('bne,ef->bnf', embeds2, pre))
    a1 = lrelu(jnp.max(e1, axis=1) @ post)
    a2 = lrelu(jnp.max(e2, axis=1) @ post)
    if embeds3 is not None:
        e3 = lrelu(jnp.einsum('bne,ef->bnf', embeds3, pre))
        a3 = lrelu(jnp.max(e3, axis=1) @ post)
        inter = (a1 + a2 + a3) / 3.0
    else:
        inter = (a1 + a2) / 2.0
    inter = lrelu(inter @ pre2)                              # (B, E)
    out = jnp.einsum('be,vef->bvf', inter, post2)            # (B, n_vec, E)
    norm = jnp.sqrt(jnp.sum(out * out, axis=2, keepdims=True))
    return out / norm


if __name__ == "__main__":
    key = jax.random.PRNGKey(0)
    ks = jax.random.split(key, 7)

    B, N, E, n_vec = 2, 8, 32, 4   # batch=2, points-per-cloud=8, embedding_dim=32, n_vec=4

    def xavier(k, shape):
        fan_in, fan_out = shape[-2], shape[-1]
        bound = math.sqrt(6.0 / (fan_in + fan_out))
        return jax.random.uniform(k, shape, jnp.float32, -bound, bound)

    embeds1 = jax.random.normal(ks[0], (B, N, E), jnp.float32)
    embeds2 = jax.random.normal(ks[1], (B, N, E), jnp.float32)
    embeds3 = jax.random.normal(ks[2], (B, N, E), jnp.float32)
    pre_mats = xavier(ks[3], (E, E))
    post_mats = xavier(ks[4], (E, E))
    pre_mats2 = xavier(ks[5], (E, E))
    post_mats2 = xavier(ks[6], (n_vec, E, E))

    # Branch without embeds3.
    out2 = jax.block_until_ready(cloud_intersection_forward(
        embeds1, embeds2, pre_mats, post_mats, pre_mats2, post_mats2))
    # Branch with embeds3.
    out3 = jax.block_until_ready(cloud_intersection_forward(
        embeds1, embeds2, pre_mats, post_mats, pre_mats2, post_mats2, embeds3))

    assert out2.shape == (B, n_vec, E)
    assert out3.shape == (B, n_vec, E)

    ref2 = _reference(embeds1, embeds2, pre_mats, post_mats, pre_mats2, post_mats2)
    ref3 = _reference(embeds1, embeds2, pre_mats, post_mats, pre_mats2, post_mats2, embeds3)
    assert bool(jnp.allclose(out2, ref2, atol=1e-5, rtol=1e-4))
    assert bool(jnp.allclose(out3, ref3, atol=1e-5, rtol=1e-4))

    # Output rows are unit L2-normalized.
    assert bool(jnp.allclose(jnp.sqrt(jnp.sum(out2 * out2, axis=-1)), 1.0, atol=1e-4))
    assert bool(jnp.allclose(jnp.sqrt(jnp.sum(out3 * out3, axis=-1)), 1.0, atol=1e-4))

    print("KERNEL_OK")
</pallas_src>

<mosaic_0001>
module attributes {stable_mosaic.version = 11 : i64} {
  func.func @kernel(%arg0: i32, %arg1: memref<1x8x32xf32, #tpu.memory_space<vmem>>, %arg2: memref<1x8x32xf32, #tpu.memory_space<vmem>>, %arg3: memref<32x32xf32, #tpu.memory_space<vmem>>, %arg4: memref<32x32xf32, #tpu.memory_space<vmem>>, %arg5: memref<32x32xf32, #tpu.memory_space<vmem>>, %arg6: memref<4x32x32xf32, #tpu.memory_space<vmem>>, %arg7: memref<1x4x32xf32, #tpu.memory_space<vmem>>) attributes {dimension_semantics = [#tpu.dimension_semantics<parallel>], iteration_bounds = array<i64: 2>, scalar_prefetch = 0 : i64, scratch_operands = 0 : i64, tpu.core_type = #tpu.core_type<tc>, window_params = [{transform_indices = @transform_0, window_bounds = array<i64: 1, 8, 32>}, {transform_indices = @transform_1, window_bounds = array<i64: 1, 8, 32>}, {pipeline_mode = #tpu.pipeline_mode<synchronous>, transform_indices = @transform_2, window_bounds = array<i64: 32, 32>}, {pipeline_mode = #tpu.pipeline_mode<synchronous>, transform_indices = @transform_3, window_bounds = array<i64: 32, 32>}, {pipeline_mode = #tpu.pipeline_mode<synchronous>, transform_indices = @transform_4, window_bounds = array<i64: 32, 32>}, {pipeline_mode = #tpu.pipeline_mode<synchronous>, transform_indices = @transform_5, window_bounds = array<i64: 4, 32, 32>}, {transform_indices = @transform_6, window_bounds = array<i64: 1, 4, 32>}]} {
    %c0 = arith.constant 0 : index
    %c0_0 = arith.constant 0 : index
    %0 = vector.load %arg3[%c0, %c0_0] : memref<32x32xf32, #tpu.memory_space<vmem>>, vector<32x32xf32>
    %c0_1 = arith.constant 0 : index
    %c0_2 = arith.constant 0 : index
    %1 = vector.load %arg4[%c0_1, %c0_2] : memref<32x32xf32, #tpu.memory_space<vmem>>, vector<32x32xf32>
    %c0_3 = arith.constant 0 : index
    %c0_4 = arith.constant 0 : index
    %2 = vector.load %arg5[%c0_3, %c0_4] : memref<32x32xf32, #tpu.memory_space<vmem>>, vector<32x32xf32>
    %c0_5 = arith.constant 0 : index
    %c0_6 = arith.constant 0 : index
    %c0_7 = arith.constant 0 : index
    %3 = vector.load %arg1[%c0_5, %c0_6, %c0_7] : memref<1x8x32xf32, #tpu.memory_space<vmem>>, vector<1x8x32xf32>
    %4 = vector.shape_cast %3 : vector<1x8x32xf32> to vector<8x32xf32>
    %cst = arith.constant dense<0.000000e+00> : vector<8x32xf32>
    %5 = tpu.matmul %4, %0, %cst {dimension_numbers = #tpu.dot_dimension_numbers<[1], [0], [0], [1], [0, 0, 1, 1], [], []>} : vector<8x32xf32>, vector<32x32xf32>, vector<8x32xf32> -> vector<8x32xf32>
    %cst_8 = arith.constant 0.000000e+00 : f32
    %6 = vector.broadcast %cst_8 : f32 to vector<8x32xf32>
    %7 = arith.cmpf oge, %5, %6 : vector<8x32xf32>
    %cst_9 = arith.constant 0.00999999977 : f32
    %8 = vector.broadcast %cst_9 : f32 to vector<8x32xf32>
    %9 = arith.mulf %8, %5 : vector<8x32xf32>
    %10 = arith.select %7, %5, %9 : vector<8x32xi1>, vector<8x32xf32>
    %cst_10 = arith.constant dense<0xFF800000> : vector<32xf32>
    %11 = vector.multi_reduction <maximumf>, %10, %cst_10 [0] : vector<8x32xf32> to vector<32xf32>
    %12 = vector.shape_cast %11 : vector<32xf32> to vector<1x32xf32>
    %cst_11 = arith.constant dense<0.000000e+00> : vector<1x32xf32>
    %13 = tpu.matmul %12, %1, %cst_11 {dimension_numbers = #tpu.dot_dimension_numbers<[1], [0], [0], [1], [0, 0, 1, 1], [], []>} : vector<1x32xf32>, vector<32x32xf32>, vector<1x32xf32> -> vector<1x32xf32>
    %cst_12 = arith.constant 0.000000e+00 : f32
    %14 = vector.broadcast %cst_12 : f32 to vector<1x32xf32>
    %15 = arith.cmpf oge, %13, %14 : vector<1x32xf32>
    %cst_13 = arith.constant 0.00999999977 : f32
    %16 = vector.broadcast %cst_13 : f32 to vector<1x32xf32>
    %17 = arith.mulf %16, %13 : vector<1x32xf32>
    %18 = arith.select %15, %13, %17 : vector<1x32xi1>, vector<1x32xf32>
    %c0_14 = arith.constant 0 : index
    %c0_15 = arith.constant 0 : index
    %c0_16 = arith.constant 0 : index
    %19 = vector.load %arg2[%c0_14, %c0_15, %c0_16] : memref<1x8x32xf32, #tpu.memory_space<vmem>>, vector<1x8x32xf32>
    %20 = vector.shape_cast %19 : vector<1x8x32xf32> to vector<8x32xf32>
    %cst_17 = arith.constant dense<0.000000e+00> : vector<8x32xf32>
    %21 = tpu.matmul %20, %0, %cst_17 {dimension_numbers = #tpu.dot_dimension_numbers<[1], [0], [0], [1], [0, 0, 1, 1], [], []>} : vector<8x32xf32>, vector<32x32xf32>, vector<8x32xf32> -> vector<8x32xf32>
    %cst_18 = arith.constant 0.000000e+00 : f32
    %22 = vector.broadcast %cst_18 : f32 to vector<8x32xf32>
    %23 = arith.cmpf oge, %21, %22 : vector<8x32xf32>
    %cst_19 = arith.constant 0.00999999977 : f32
    %24 = vector.broadcast %cst_19 : f32 to vector<8x32xf32>
    %25 = arith.mulf %24, %21 : vector<8x32xf32>
    %26 = arith.select %23, %21, %25 : vector<8x32xi1>, vector<8x32xf32>
    %cst_20 = arith.constant dense<0xFF800000> : vector<32xf32>
    %27 = vector.multi_reduction <maximumf>, %26, %cst_20 [0] : vector<8x32xf32> to vector<32xf32>
    %28 = vector.shape_cast %27 : vector<32xf32> to vector<1x32xf32>
    %cst_21 = arith.constant dense<0.000000e+00> : vector<1x32xf32>
    %29 = tpu.matmul %28, %1, %cst_21 {dimension_numbers = #tpu.dot_dimension_numbers<[1], [0], [0], [1], [0, 0, 1, 1], [], []>} : vector<1x32xf32>, vector<32x32xf32>, vector<1x32xf32> -> vector<1x32xf32>
    %cst_22 = arith.constant 0.000000e+00 : f32
    %30 = vector.broadcast %cst_22 : f32 to vector<1x32xf32>
    %31 = arith.cmpf oge, %29, %30 : vector<1x32xf32>
    %cst_23 = arith.constant 0.00999999977 : f32
    %32 = vector.broadcast %cst_23 : f32 to vector<1x32xf32>
    %33 = arith.mulf %32, %29 : vector<1x32xf32>
    %34 = arith.select %31, %29, %33 : vector<1x32xi1>, vector<1x32xf32>
    %35 = arith.addf %18, %34 : vector<1x32xf32>
    %cst_24 = arith.constant 5.000000e-01 : f32
    %36 = vector.broadcast %cst_24 : f32 to vector<1x32xf32>
    %37 = arith.mulf %35, %36 : vector<1x32xf32>
    %cst_25 = arith.constant dense<0.000000e+00> : vector<1x32xf32>
    %38 = tpu.matmul %37, %2, %cst_25 {dimension_numbers = #tpu.dot_dimension_numbers<[1], [0], [0], [1], [0, 0, 1, 1], [], []>} : vector<1x32xf32>, vector<32x32xf32>, vector<1x32xf32> -> vector<1x32xf32>
    %cst_26 = arith.constant 0.000000e+00 : f32
    %39 = vector.broadcast %cst_26 : f32 to vector<1x32xf32>
    %40 = arith.cmpf oge, %38, %39 : vector<1x32xf32>
    %cst_27 = arith.constant 0.00999999977 : f32
    %41 = vector.broadcast %cst_27 : f32 to vector<1x32xf32>
    %42 = arith.mulf %41, %38 : vector<1x32xf32>
    %43 = arith.select %40, %38, %42 : vector<1x32xi1>, vector<1x32xf32>
    %c0_28 = arith.constant 0 : index
    %c0_29 = arith.constant 0 : index
    %c0_30 = arith.constant 0 : index
    %44 = vector.load %arg6[%c0_28, %c0_29, %c0_30] : memref<4x32x32xf32, #tpu.memory_space<vmem>>, vector<1x32x32xf32>
    %45 = vector.shape_cast %44 : vector<1x32x32xf32> to vector<32x32xf32>
    %cst_31 = arith.constant dense<0.000000e+00> : vector<1x32xf32>
    %46 = tpu.matmul %43, %45, %cst_31 {dimension_numbers = #tpu.dot_dimension_numbers<[1], [0], [0], [1], [0, 0, 1, 1], [], []>} : vector<1x32xf32>, vector<32x32xf32>, vector<1x32xf32> -> vector<1x32xf32>
    %c1 = arith.constant 1 : index
    %c0_32 = arith.constant 0 : index
    %c0_33 = arith.constant 0 : index
    %47 = vector.load %arg6[%c1, %c0_32, %c0_33] : memref<4x32x32xf32, #tpu.memory_space<vmem>>, vector<1x32x32xf32>
    %48 = vector.shape_cast %47 : vector<1x32x32xf32> to vector<32x32xf32>
    %cst_34 = arith.constant dense<0.000000e+00> : vector<1x32xf32>
    %49 = tpu.matmul %43, %48, %cst_34 {dimension_numbers = #tpu.dot_dimension_numbers<[1], [0], [0], [1], [0, 0, 1, 1], [], []>} : vector<1x32xf32>, vector<32x32xf32>, vector<1x32xf32> -> vector<1x32xf32>
    %c2 = arith.constant 2 : index
    %c0_35 = arith.constant 0 : index
    %c0_36 = arith.constant 0 : index
    %50 = vector.load %arg6[%c2, %c0_35, %c0_36] : memref<4x32x32xf32, #tpu.memory_space<vmem>>, vector<1x32x32xf32>
    %51 = vector.shape_cast %50 : vector<1x32x32xf32> to vector<32x32xf32>
    %cst_37 = arith.constant dense<0.000000e+00> : vector<1x32xf32>
    %52 = tpu.matmul %43, %51, %cst_37 {dimension_numbers = #tpu.dot_dimension_numbers<[1], [0], [0], [1], [0, 0, 1, 1], [], []>} : vector<1x32xf32>, vector<32x32xf32>, vector<1x32xf32> -> vector<1x32xf32>
    %c3 = arith.constant 3 : index
    %c0_38 = arith.constant 0 : index
    %c0_39 = arith.constant 0 : index
    %53 = vector.load %arg6[%c3, %c0_38, %c0_39] : memref<4x32x32xf32, #tpu.memory_space<vmem>>, vector<1x32x32xf32>
    %54 = vector.shape_cast %53 : vector<1x32x32xf32> to vector<32x32xf32>
    %cst_40 = arith.constant dense<0.000000e+00> : vector<1x32xf32>
    %55 = tpu.matmul %43, %54, %cst_40 {dimension_numbers = #tpu.dot_dimension_numbers<[1], [0], [0], [1], [0, 0, 1, 1], [], []>} : vector<1x32xf32>, vector<32x32xf32>, vector<1x32xf32> -> vector<1x32xf32>
    %56 = tpu.concatenate %46, %49, %52, %55 in 0 : vector<1x32xf32>, vector<1x32xf32>, vector<1x32xf32>, vector<1x32xf32> -> vector<4x32xf32>
    %57 = arith.mulf %56, %56 : vector<4x32xf32>
    %cst_41 = arith.constant dense<0.000000e+00> : vector<4xf32>
    %58 = vector.multi_reduction <add>, %57, %cst_41 [1] : vector<4x32xf32> to vector<4xf32>
    %59 = vector.shape_cast %58 : vector<4xf32> to vector<4x1xf32>
    %60 = math.rsqrt %59 : vector<4x1xf32>
    %61 = vector.broadcast %60 : vector<4x1xf32> to vector<4x32xf32>
    %62 = arith.mulf %56, %61 : vector<4x32xf32>
    %63 = vector.shape_cast %62 : vector<4x32xf32> to vector<1x4x32xf32>
    %c0_42 = arith.constant 0 : index
    %c0_43 = arith.constant 0 : index
    %c0_44 = arith.constant 0 : index
    %64 = vector.load %arg7[%c0_42, %c0_43, %c0_44] : memref<1x4x32xf32, #tpu.memory_space<vmem>>, vector<1x4x32xf32>
    tpu.vector_store %arg7[%c0_42, %c0_43, %c0_44], %63 {strides = array<i32>} : memref<1x4x32xf32, #tpu.memory_space<vmem>>, vector<1x4x32xf32>,
    return
  }
  func.func @transform_0(%arg0: i32) -> (i32, i32, i32) {
    %c0_i32 = arith.constant 0 : i32
    %c0_i32_0 = arith.constant 0 : i32
    %c0_i32_1 = arith.constant 0 : i32
    return %arg0, %c0_i32, %c0_i32_0 : i32, i32, i32
  }
  func.func @transform_1(%arg0: i32) -> (i32, i32, i32) {
    %c0_i32 = arith.constant 0 : i32
    %c0_i32_0 = arith.constant 0 : i32
    %c0_i32_1 = arith.constant 0 : i32
    return %arg0, %c0_i32, %c0_i32_0 : i32, i32, i32
  }
  func.func @transform_2(%arg0: i32) -> (i32, i32) {
    %c0_i32 = arith.constant 0 : i32
    %c0_i32_0 = arith.constant 0 : i32
    %c0_i32_1 = arith.constant 0 : i32
    return %c0_i32, %c0_i32_0 : i32, i32
  }
  func.func @transform_3(%arg0: i32) -> (i32, i32) {
    %c0_i32 = arith.constant 0 : i32
    %c0_i32_0 = arith.constant 0 : i32
    %c0_i32_1 = arith.constant 0 : i32
    return %c0_i32, %c0_i32_0 : i32, i32
  }
  func.func @transform_4(%arg0: i32) -> (i32, i32) {
    %c0_i32 = arith.constant 0 : i32
    %c0_i32_0 = arith.constant 0 : i32
    %c0_i32_1 = arith.constant 0 : i32
    return %c0_i32, %c0_i32_0 : i32, i32
  }
  func.func @transform_5(%arg0: i32) -> (i32, i32, i32) {
    %c0_i32 = arith.constant 0 : i32
    %c0_i32_0 = arith.constant 0 : i32
    %c0_i32_1 = arith.constant 0 : i32
    %c0_i32_2 = arith.constant 0 : i32
    return %c0_i32, %c0_i32_0, %c0_i32_1 : i32, i32, i32
  }
  func.func @transform_6(%arg0: i32) -> (i32, i32, i32) {
    %c0_i32 = arith.constant 0 : i32
    %c0_i32_0 = arith.constant 0 : i32
    %c0_i32_1 = arith.constant 0 : i32
    return %arg0, %c0_i32, %c0_i32_0 : i32, i32, i32
  }
}

</mosaic_0001>

<llo_original>
// kernel: tpu_custom_call.1
$region0: #{tpu_custom_call.1}
  #allocation0 [shape = 'u32[]', space=smem, size = 0x4, offset = 0x4, fixed_abs, tag = 'smem constant byte address 0x4 - core index']
  #allocation1 [shape = 'u32[144,128]{1,0:T(1,128)}', space=vmem, size = 0x12000, scoped, tag = 'internal scratch']
  %s0 = inlined_call_operand.hbm [shape: f32[2,8,32], index: 0, kind: input, shape index: {}]
  %s1 = inlined_call_operand.hbm [shape: f32[2,8,32], index: 1, kind: input, shape index: {}]
  %s2 = inlined_call_operand.hbm [shape: f32[32,32], index: 2, kind: input, shape index: {}]
  %s3 = inlined_call_operand.hbm [shape: f32[32,32], index: 3, kind: input, shape index: {}]
  %s4 = inlined_call_operand.hbm [shape: f32[32,32], index: 4, kind: input, shape index: {}]
  %s5 = inlined_call_operand.hbm [shape: f32[4,32,32], index: 5, kind: input, shape index: {}]
  %s6 = inlined_call_operand.hbm [shape: f32[2,4,32], index: 6, kind: output, shape index: {}]
  %s7 = sld [smem:[#allocation0]]
  $region81: #{tpu_custom_call.1} parent=0
    _
  %s9 = ssub.s32 1, %s7
  %s10 = scalar_select 0, %s9, %s7
  $region1: #{tpu_custom_call.1} parent=0
    #allocation2 [shape = 'u8[8192]{0}', space=vmem, size = 0x2000, scoped, tag = 'input window, operand 0']
    #allocation3 [shape = 's32[2]{0}', space=sflag, size = 0x8, scoped, tag = 'scoped memory for tpu_custom_call.1']
    #allocation4 [shape = 's32[2]{0}', space=sflag, size = 0x8, scoped, tag = 'scoped memory for tpu_custom_call.1']
    #allocation5 [shape = 'u8[8192]{0}', space=vmem, size = 0x2000, scoped, tag = 'input window, operand 1']
    #allocation6 [shape = 's32[2]{0}', space=sflag, size = 0x8, scoped, tag = 'scoped memory for tpu_custom_call.1']
    #allocation7 [shape = 'u8[16384]{0}', space=vmem, size = 0x4000, scoped, tag = 'input window, operand 2, single buffered']
    #allocation8 [shape = 'u8[16384]{0}', space=vmem, size = 0x4000, scoped, tag = 'input window, operand 3, single buffered']
    #allocation9 [shape = 's32[1]{0}', space=sflag, size = 0x4, scoped, tag = 'scoped memory for tpu_custom_call.1']
    #allocation10 [shape = 'u8[16384]{0}', space=vmem, size = 0x4000, scoped, tag = 'input window, operand 4, single buffered']
    #allocation11 [shape = 'u8[65536]{0}', space=vmem, size = 0x10000, scoped, tag = 'input window, operand 5, single buffered']
    #allocation12 [shape = 's32[1]{0}', space=sflag, size = 0x4, scoped, tag = 'scoped memory for tpu_custom_call.1']
    #allocation13 [shape = 'u8[4096]{0}', space=vmem, size = 0x1000, scoped, tag = 'output window, operand 0']
    %11 = vsyncpa [#allocation3], 0
    %s12 = scalar_lea.sflag [#allocation3], 1
    %13 = vsyncpa %s12, 0
    %14 = vsyncpa [#allocation6], 0
    %s15 = scalar_lea.sflag [#allocation6], 1
    %16 = vsyncpa %s15, 0
    %17 = vsyncpa [#allocation9], 0
    %18 = vsyncpa [#allocation12], 0
    %19 = vsyncpa [#allocation4], 0
    %s20 = scalar_lea.sflag [#allocation4], 1
    %21 = vsyncpa %s20, 0
    loop: start=0, step=1, limit=4
    $region2: #{tpu_custom_call.1} parent=1 // loop_pre_header
      _
    $region3: #{tpu_custom_call.1} parent=1 // loop_header
      %s23 = sphi 0, %s27
      %p24 = scmp.ge.s32.totalorder %s23, 4
      %s33 = sphi 0, %s35
      %s36 = sphi 0, %s33
      %s37 = sphi 0, %s36
      %s53 = sphi 0, %s37
      %s59 = sphi 0, %s61
      %s62 = sphi 0, %s59
      %s63 = sphi 0, %s62
      %s79 = sphi 0, %s63
      %s83 = sphi 0, %s83
      %s85 = sphi 0, %s83
      %s86 = sphi 0, %s85
      %s100 = sphi 0, %s86
      %s104 = sphi 0, %s104
      %s106 = sphi 0, %s104
      %s107 = sphi 0, %s106
      %s121 = sphi 0, %s107
      %s125 = sphi 0, %s125
      %s127 = sphi 0, %s125
      %s128 = sphi 0, %s127
      %s142 = sphi 0, %s128
      %s146 = sphi 0, %s146
      %s148 = sphi 0, %s146
      %s149 = sphi 0, %s148
      %s163 = sphi 0, %s149
      %s169 = sphi 0, %s171
      %s172 = sphi 0, %s169
      %s173 = sphi 0, %s172
      %s189 = sphi 0, %s173
    $region4: #{tpu_custom_call.1} parent=1 // loop_header_branch
      %26 = sbr.rel (%p24) target = $region8
    $region5: #{tpu_custom_call.1} parent=1 // loop_body
      %s28 = ssub.s32 %s23, 1
      %s29 = ssub.s32 %s23, 2
      %s30 = sadd.s32 %s23, 1
      %s31 = ssub.s32 %s23, %s30
      %p32 = scmp.eq.s32.totalorder %s31, 0
      %s34 = sadd.s32 %s33, 1
      %s35 = scalar_select %p32, %s33, %s34
      %p38 = pneg %p32
      %p39 = scmp.eq.s32.totalorder %s23, 1
      %p40 = por %p38, %p39
      %p41 = scmp.ne.s32.totalorder %s33, %s36
      %p42 = scmp.eq.s32.totalorder %s23, 0
      %p43 = por %p41, %p42
      %p44 = scmp.ne.s32.totalorder %s33, %s36
      %p45 = scmp.eq.s32.totalorder %s28, 1
      %p46 = por %p44, %p45
      %p47 = scmp.ne.s32.totalorder %s36, %s37
      %p48 = scmp.eq.s32.totalorder %s28, 0
      %p49 = por %p47, %p48
      %p50 = scmp.ne.s32.totalorder %s36, %s37
      %p51 = scmp.eq.s32.totalorder %s29, 1
      %p52 = por %p50, %p51
      %p54 = scmp.ne.s32.totalorder %s37, %s53
      %p55 = scmp.eq.s32.totalorder %s29, 0
      %p56 = por %p54, %p55
      %s57 = ssub.s32 %s23, %s30
      %p58 = scmp.eq.s32.totalorder %s57, 0
      %s60 = sadd.s32 %s59, 1
      %s61 = scalar_select %p58, %s59, %s60
      %p64 = pneg %p58
      %p65 = scmp.eq.s32.totalorder %s23, 1
      %p66 = por %p64, %p65
      %p67 = scmp.ne.s32.totalorder %s59, %s62
      %p68 = scmp.eq.s32.totalorder %s23, 0
      %p69 = por %p67, %p68
      %p70 = scmp.ne.s32.totalorder %s59, %s62
      %p71 = scmp.eq.s32.totalorder %s28, 1
      %p72 = por %p70, %p71
      %p73 = scmp.ne.s32.totalorder %s62, %s63
      %p74 = scmp.eq.s32.totalorder %s28, 0
      %p75 = por %p73, %p74
      %p76 = scmp.ne.s32.totalorder %s62, %s63
      %p77 = scmp.eq.s32.totalorder %s29, 1
      %p78 = por %p76, %p77
      %p80 = scmp.ne.s32.totalorder %s63, %s79
      %p81 = scmp.eq.s32.totalorder %s29, 0
      %p82 = por %p80, %p81
      %s84 = sadd.s32 %s83, 1
      %p87 = scmp.eq.s32.totalorder %s23, 1
      %p88 = scmp.ne.s32.totalorder %s83, %s85
      %p89 = scmp.eq.s32.totalorder %s23, 0
      %p90 = por %p88, %p89
      %p91 = scmp.ne.s32.totalorder %s83, %s85
      %p92 = scmp.eq.s32.totalorder %s28, 1
      %p93 = por %p91, %p92
      %p94 = scmp.ne.s32.totalorder %s85, %s86
      %p95 = scmp.eq.s32.totalorder %s28, 0
      %p96 = por %p94, %p95
      %p97 = scmp.ne.s32.totalorder %s85, %s86
      %p98 = scmp.eq.s32.totalorder %s29, 1
      %p99 = por %p97, %p98
      %p101 = scmp.ne.s32.totalorder %s86, %s100
      %p102 = scmp.eq.s32.totalorder %s29, 0
      %p103 = por %p101, %p102
      %s105 = sadd.s32 %s104, 1
      %p108 = scmp.eq.s32.totalorder %s23, 1
      %p109 = scmp.ne.s32.totalorder %s104, %s106
      %p110 = scmp.eq.s32.totalorder %s23, 0
      %p111 = por %p109, %p110
      %p112 = scmp.ne.s32.totalorder %s104, %s106
      %p113 = scmp.eq.s32.totalorder %s28, 1
      %p114 = por %p112, %p113
      %p115 = scmp.ne.s32.totalorder %s106, %s107
      %p116 = scmp.eq.s32.totalorder %s28, 0
      %p117 = por %p115, %p116
      %p118 = scmp.ne.s32.totalorder %s106, %s107
      %p119 = scmp.eq.s32.totalorder %s29, 1
      %p120 = por %p118, %p119
      %p122 = scmp.ne.s32.totalorder %s107, %s121
      %p123 = scmp.eq.s32.totalorder %s29, 0
      %p124 = por %p122, %p123
      %s126 = sadd.s32 %s125, 1
      %p129 = scmp.eq.s32.totalorder %s23, 1
      %p130 = scmp.ne.s32.totalorder %s125, %s127
      %p131 = scmp.eq.s32.totalorder %s23, 0
      %p132 = por %p130, %p131
      %p133 = scmp.ne.s32.totalorder %s125, %s127
      %p134 = scmp.eq.s32.totalorder %s28, 1
      %p135 = por %p133, %p134
      %p136 = scmp.ne.s32.totalorder %s127, %s128
      %p137 = scmp.eq.s32.totalorder %s28, 0
      %p138 = por %p136, %p137
      %p139 = scmp.ne.s32.totalorder %s127, %s128
      %p140 = scmp.eq.s32.totalorder %s29, 1
      %p141 = por %p139, %p140
      %p143 = scmp.ne.s32.totalorder %s128, %s142
      %p144 = scmp.eq.s32.totalorder %s29, 0
      %p145 = por %p143, %p144
      %s147 = sadd.s32 %s146, 1
      %p150 = scmp.eq.s32.totalorder %s23, 1
      %p151 = scmp.ne.s32.totalorder %s146, %s148
      %p152 = scmp.eq.s32.totalorder %s23, 0
      %p153 = por %p151, %p152
      %p154 = scmp.ne.s32.totalorder %s146, %s148
      %p155 = scmp.eq.s32.totalorder %s28, 1
      %p156 = por %p154, %p155
      %p157 = scmp.ne.s32.totalorder %s148, %s149
      %p158 = scmp.eq.s32.totalorder %s28, 0
      %p159 = por %p157, %p158
      %p160 = scmp.ne.s32.totalorder %s148, %s149
      %p161 = scmp.eq.s32.totalorder %s29, 1
      %p162 = por %p160, %p161
      %p164 = scmp.ne.s32.totalorder %s149, %s163
      %p165 = scmp.eq.s32.totalorder %s29, 0
      %p166 = por %p164, %p165
      %s167 = ssub.s32 %s23, %s30
      %p168 = scmp.eq.s32.totalorder %s167, 0
      %s170 = sadd.s32 %s169, 1
      %s171 = scalar_select %p168, %s169, %s170
      %p174 = pneg %p168
      %p175 = scmp.eq.s32.totalorder %s23, 1
      %p176 = por %p174, %p175
      %p177 = scmp.ne.s32.totalorder %s169, %s172
      %p178 = scmp.eq.s32.totalorder %s23, 0
      %p179 = por %p177, %p178
      %p180 = scmp.ne.s32.totalorder %s169, %s172
      %p181 = scmp.eq.s32.totalorder %s28, 1
      %p182 = por %p180, %p181
      %p183 = scmp.ne.s32.totalorder %s172, %s173
      %p184 = scmp.eq.s32.totalorder %s28, 0
      %p185 = por %p183, %p184
      %p186 = scmp.ne.s32.totalorder %s172, %s173
      %p187 = scmp.eq.s32.totalorder %s29, 1
      %p188 = por %p186, %p187
      %p190 = scmp.ne.s32.totalorder %s173, %s189
      %p191 = scmp.eq.s32.totalorder %s29, 0
      %p192 = por %p190, %p191
      %p193 = scmp.le.s32.totalorder 1, %s23
      %p194 = scmp.lt.s32.totalorder %s23, 3
      %p195 = pnand %p193, %p194
      %p196 = pneg %p195
      // Predicated region
      $region9: #{tpu_custom_call.1} parent=5 // pred_check
        _
      $region10: #{tpu_custom_call.1} parent=5 // pred_check_branch
        %198 = sbr.rel (%p195) target = $region12
      $region11: #{tpu_custom_call.1} parent=5 // pred_region
        %s199 = ssub.s32 %s23, 1
        // Predicated region
        $region13: #{tpu_custom_call.1} parent=11 // pred_check
          %p200 = pneg %p96
        $region14: #{tpu_custom_call.1} parent=11 // pred_check_branch
          %202 = sbr.rel (%p200) target = $region16
        $region15: #{tpu_custom_call.1} parent=11 // pred_region
          %s204 = ssub.s32 512, 512
          %205 = vsyncadd [#allocation6], %s204
          %s206 = sshll.u32 [#allocation7], 4
          %s207 = int_to_ptr.vmem [resolvable:$true] %s206
          %212 = dma.hbm_to_vmem [thread:$0]  %s2, 512, %s207, [#allocation6], 128, 128, 8
        $region16: #{tpu_custom_call.1} parent=11 // pred_fallthru
          _
        // Predicated region
        $region17: #{tpu_custom_call.1} parent=11 // pred_check
          %p213 = pneg %p117
        $region18: #{tpu_custom_call.1} parent=11 // pred_check_branch
          %215 = sbr.rel (%p213) target = $region20
        $region19: #{tpu_custom_call.1} parent=11 // pred_region
          %s217 = ssub.s32 512, 512
          %218 = vsyncadd [#allocation9], %s217
          %s219 = sshll.u32 [#allocation8], 4
          %s220 = int_to_ptr.vmem [resolvable:$true] %s219
          %225 = dma.hbm_to_vmem [thread:$0]  %s3, 512, %s220, [#allocation9], 128, 128, 8
        $region20: #{tpu_custom_call.1} parent=11 // pred_fallthru
          _
        // Predicated region
        $region21: #{tpu_custom_call.1} parent=11 // pred_check
          %p226 = pneg %p138
        $region22: #{tpu_custom_call.1} parent=11 // pred_check_branch
          %228 = sbr.rel (%p226) target = $region24
        $region23: #{tpu_custom_call.1} parent=11 // pred_region
          %s230 = ssub.s32 512, 512
          %231 = vsyncadd [#allocation9], %s230
          %s232 = sshll.u32 [#allocation10], 4
          %s233 = int_to_ptr.vmem [resolvable:$true] %s232
          %238 = dma.hbm_to_vmem [thread:$0]  %s4, 512, %s233, [#allocation9], 128, 128, 8
        $region24: #{tpu_custom_call.1} parent=11 // pred_fallthru
          _
        // Predicated region
        $region25: #{tpu_custom_call.1} parent=11 // pred_check
          %p239 = pneg %p159
        $region26: #{tpu_custom_call.1} parent=11 // pred_check_branch
          %241 = sbr.rel (%p239) target = $region28
        $region27: #{tpu_custom_call.1} parent=11 // pred_region
          %s243 = ssub.s32 2048, 2048
          %244 = vsyncadd [#allocation12], %s243
          %s245 = sshll.u32 [#allocation11], 4
          %s246 = int_to_ptr.vmem [resolvable:$true] %s245
          %251 = dma.hbm_to_vmem [thread:$0]  %s5, 2048, %s246, [#allocation12], 128, 128, 8
        $region28: #{tpu_custom_call.1} parent=11 // pred_fallthru
          _
      $region12: #{tpu_custom_call.1} parent=5 // pred_fallthru
        _
      %p252 = scmp.lt.s32.totalorder %s23, 2
      // Predicated region
      $region29: #{tpu_custom_call.1} parent=5 // pred_check
        %p253 = pneg %p252
      $region30: #{tpu_custom_call.1} parent=5 // pred_check_branch
        %255 = sbr.rel (%p253) target = $region32
      $region31: #{tpu_custom_call.1} parent=5 // pred_region
        // Predicated region
        $region33: #{tpu_custom_call.1} parent=31 // pred_check
          %p256 = pneg %p43
        $region34: #{tpu_custom_call.1} parent=31 // pred_check_branch
          %258 = sbr.rel (%p256) target = $region36
        $region35: #{tpu_custom_call.1} parent=31 // pred_region
          %s259 = sand.u32 %s33, 1
          %s260 = scalar_lea.sflag [#allocation3], %s259
          %s261 = sand.u32 %s33, 1
          %s262 = smul.addr %s261, 8
          %s263 = scalar_lea.vmem [#allocation2], %s262
          %s265 = ssub.s32 128, 128
          %266 = vsyncadd %s260, %s265
          %s267 = smul.addr %s23, 128
          %s268 = scalar_lea.hbm %s0, %s267
          %s270 = sshll.u32 %s263, 4
          %s271 = int_to_ptr.vmem [resolvable:$true] %s270
          %273 = dma.hbm_to_vmem [thread:$0]  %s268, 128, %s271, %s260
        $region36: #{tpu_custom_call.1} parent=31 // pred_fallthru
          _
        // Predicated region
        $region37: #{tpu_custom_call.1} parent=31 // pred_check
          %p274 = pneg %p69
        $region38: #{tpu_custom_call.1} parent=31 // pred_check_branch
          %276 = sbr.rel (%p274) target = $region40
        $region39: #{tpu_custom_call.1} parent=31 // pred_region
          %s277 = sand.u32 %s23, 1
          %s278 = scalar_lea.sflag [#allocation6], %s277
          %s279 = sand.u32 %s59, 1
          %s280 = smul.addr %s279, 8
          %s281 = scalar_lea.vmem [#allocation5], %s280
          %s283 = ssub.s32 128, 128
          %284 = vsyncadd %s278, %s283
          %s285 = smul.addr %s23, 128
          %s286 = scalar_lea.hbm %s1, %s285
          %s288 = sshll.u32 %s281, 4
          %s289 = int_to_ptr.vmem [resolvable:$true] %s288
          %291 = dma.hbm_to_vmem [thread:$0]  %s286, 128, %s289, %s278
        $region40: #{tpu_custom_call.1} parent=31 // pred_fallthru
          _
      $region32: #{tpu_custom_call.1} parent=5 // pred_fallthru
        _
      %p292 = scmp.le.s32.totalorder 1, %s23
      %p293 = scmp.lt.s32.totalorder %s23, 3
      %p294 = pnand %p292, %p293
      %p295 = pneg %p294
      // Predicated region
      $region41: #{tpu_custom_call.1} parent=5 // pred_check
        _
      $region42: #{tpu_custom_call.1} parent=5 // pred_check_branch
        %297 = sbr.rel (%p294) target = $region44
      $region43: #{tpu_custom_call.1} parent=5 // pred_region
        %s298 = ssub.s32 %s23, 1
        %s299 = sand.u32 %s36, 1
        %s300 = scalar_lea.sflag [#allocation3], %s299
        %s301 = sand.u32 %s36, 1
        %s302 = smul.addr %s301, 8
        %s303 = scalar_lea.vmem [#allocation2], %s302
        // Predicated region
        $region45: #{tpu_custom_call.1} parent=43 // pred_check
          %p304 = pneg %p49
        $region46: #{tpu_custom_call.1} parent=43 // pred_check_branch
          %306 = sbr.rel (%p304) target = $region48
        $region47: #{tpu_custom_call.1} parent=43 // pred_region
          %307 = dma.done %s300, 128
        $region48: #{tpu_custom_call.1} parent=43 // pred_fallthru
          _
        %s308 = sand.u32 %s28, 1
        %s309 = scalar_lea.sflag [#allocation6], %s308
        %s310 = sand.u32 %s62, 1
        %s311 = smul.addr %s310, 8
        %s312 = scalar_lea.vmem [#allocation5], %s311
        // Predicated region
        $region49: #{tpu_custom_call.1} parent=43 // pred_check
          %p313 = pneg %p75
        $region50: #{tpu_custom_call.1} parent=43 // pred_check_branch
          %315 = sbr.rel (%p313) target = $region52
        $region51: #{tpu_custom_call.1} parent=43 // pred_region
          %316 = dma.done %s309, 128
        $region52: #{tpu_custom_call.1} parent=43 // pred_fallthru
          _
        // Predicated region
        $region53: #{tpu_custom_call.1} parent=43 // pred_check
          %p317 = pneg %p96
        $region54: #{tpu_custom_call.1} parent=43 // pred_check_branch
          %319 = sbr.rel (%p317) target = $region56
        $region55: #{tpu_custom_call.1} parent=43 // pred_region
          %320 = dma.done [#allocation6], 512
        $region56: #{tpu_custom_call.1} parent=43 // pred_fallthru
          _
        // Predicated region
        $region57: #{tpu_custom_call.1} parent=43 // pred_check
          %p321 = pneg %p117
        $region58: #{tpu_custom_call.1} parent=43 // pred_check_branch
          %323 = sbr.rel (%p321) target = $region60
        $region59: #{tpu_custom_call.1} parent=43 // pred_region
          %324 = dma.done [#allocation9], 512
        $region60: #{tpu_custom_call.1} parent=43 // pred_fallthru
          _
        // Predicated region
        $region61: #{tpu_custom_call.1} parent=43 // pred_check
          %p325 = pneg %p138
        $region62: #{tpu_custom_call.1} parent=43 // pred_check_branch
          %327 = sbr.rel (%p325) target = $region64
        $region63: #{tpu_custom_call.1} parent=43 // pred_region
          %328 = dma.done [#allocation9], 512
        $region64: #{tpu_custom_call.1} parent=43 // pred_fallthru
          _
        // Predicated region
        $region65: #{tpu_custom_call.1} parent=43 // pred_check
          %p329 = pneg %p159
        $region66: #{tpu_custom_call.1} parent=43 // pred_check_branch
          %331 = sbr.rel (%p329) target = $region68
        $region67: #{tpu_custom_call.1} parent=43 // pred_region
          %332 = dma.done [#allocation12], 2048
        $region68: #{tpu_custom_call.1} parent=43 // pred_fallthru
          _
        %s333 = sand.u32 %s36, 1
        %s334 = scalar_lea.sflag [#allocation3], %s333
        %s335 = sand.u32 %s36, 1
        %s336 = smul.addr %s335, 8
        %s337 = scalar_lea.vmem [#allocation2], %s336
        %p338 = pneg %p49
        %p339 = pneg %p46
        %s340 = sand.u32 %s28, 1
        %s341 = scalar_lea.sflag [#allocation6], %s340
        %s342 = sand.u32 %s62, 1
        %s343 = smul.addr %s342, 8
        %s344 = scalar_lea.vmem [#allocation5], %s343
        %p345 = pneg %p75
        %p346 = pneg %p72
        %p347 = pneg %p96
        %p348 = pneg %p93
        %p349 = pneg %p117
        %p350 = pneg %p114
        %p351 = pneg %p138
        %p352 = pneg %p135
        %p353 = pneg %p159
        %p354 = pneg %p156
        %p355 = pneg %p185
        %p356 = pneg %p182
        %s357 = sand.u32 %s172, 1
        %s358 = scalar_lea.sflag [#allocation4], %s357
        %s359 = sand.u32 %s172, 1
        %s360 = smul.addr %s359, 4
        %s361 = scalar_lea.vmem [#allocation13], %s360
        %v362 = vld [vmem:[#allocation7] sm:$0xff]
        %v363 = vld [vmem:[#allocation7 + $0x8] sm:$0xff]
        %v364 = vld [vmem:[#allocation7 + $0x10] sm:$0xff]
        %v365 = vld [vmem:[#allocation7 + $0x18] sm:$0xff]
        %v366 = vld [vmem:[#allocation8] sm:$0xff]
        %v367 = vld [vmem:[#allocation8 + $0x8] sm:$0xff]
        %v368 = vld [vmem:[#allocation8 + $0x10] sm:$0xff]
        %v369 = vld [vmem:[#allocation8 + $0x18] sm:$0xff]
        %v370 = vld [vmem:[#allocation10] sm:$0xff]
        %v371 = vld [vmem:[#allocation10 + $0x8] sm:$0xff]
        %v372 = vld [vmem:[#allocation10 + $0x10] sm:$0xff]
        %v373 = vld [vmem:[#allocation10 + $0x18] sm:$0xff]
        %v374 = vld [vmem:[%s303] sm:$0xff]
        %vm375 = vcmask 261120
        %v377 = vsel %vm375, %v374, 0
        %379 = vmatprep.subr.mxu0 0.0
        %380 = vmatpush1.msra.mxu0 0.0
        %381 = vmatprep.subr.mxu0 0.0
        %382 = vmatpush1.msra.mxu0 0.0
        %383 = vmatprep.subr.mxu0 0.0
        %384 = vmatpush1.msra.mxu0 0.0
        %385 = vmatprep.subr.mxu0 0.0
        %386 = vmatpush1.msra.mxu0 0.0
        %387 = vmatprep.subr.mxu0 0.0
        %388 = vmatpush1.msra.mxu0 0.0
        %389 = vmatprep.subr.mxu0 0.0
        %390 = vmatpush1.msra.mxu0 0.0
        %391 = vmatprep.subr.mxu0 0.0
        %392 = vmatpush1.msra.mxu0 0.0
        %393 = vmatprep.subr.mxu0 0.0
        %394 = vmatpush1.msra.mxu0 0.0
        %395 = vmatprep.subr.mxu0 0.0
        %396 = vmatpush1.msra.mxu0 0.0
        %397 = vmatprep.subr.mxu0 0.0
        %398 = vmatpush1.msra.mxu0 0.0
        %399 = vmatprep.subr.mxu0 0.0
        %400 = vmatpush1.msra.mxu0 0.0
        %401 = vmatprep.subr.mxu0 0.0
        %402 = vmatpush1.msra.mxu0 0.0
        %403 = vmatprep.subr.mxu0 0.0
        %404 = vmatpush1.msra.mxu0 %v365
        %405 = vmatprep.subr.mxu0 0.0
        %406 = vmatpush1.msra.mxu0 %v364
        %407 = vmatprep.subr.mxu0 0.0
        %408 = vmatpush1.msra.mxu0 %v363
        %409 = vmatprep.subr.mxu0 0.0
        %410 = vmatpush1.msra.mxu0 %v362
        %411 = vmatprep.subr.mxu0 0.0
        %412 = vmatpush2.msra.mxu0 0.0
        %413 = vmatprep.subr.mxu0 0.0
        %414 = vmatpush2.msra.mxu0 0.0
        %415 = vmatprep.subr.mxu0 0.0
        %416 = vmatpush2.msra.mxu0 0.0
        %417 = vmatprep.subr.mxu0 0.0
        %418 = vmatpush2.msra.mxu0 0.0
        %419 = vmatprep.subr.mxu0 0.0
        %420 = vmatpush2.msra.mxu0 0.0
        %421 = vmatprep.subr.mxu0 0.0
        %422 = vmatpush2.msra.mxu0 0.0
        %423 = vmatprep.subr.mxu0 0.0
        %424 = vmatpush2.msra.mxu0 0.0
        %425 = vmatprep.subr.mxu0 0.0
        %426 = vmatpush2.msra.mxu0 0.0
        %427 = vmatprep.subr.mxu0 0.0
        %428 = vmatpush2.msra.mxu0 0.0
        %429 = vmatprep.subr.mxu0 0.0
        %430 = vmatpush2.msra.mxu0 0.0
        %431 = vmatprep.subr.mxu0 0.0
        %432 = vmatpush2.msra.mxu0 0.0
        %433 = vmatprep.subr.mxu0 0.0
        %434 = vmatpush2.msra.mxu0 0.0
        %435 = vmatprep.subr.mxu0 0.0
        %436 = vmatpush2.msra.mxu0 0.0
        %437 = vmatprep.subr.mxu0 0.0
        %438 = vmatpush2.msra.mxu0 0.0
        %439 = vmatprep.subr.mxu0 0.0
        %440 = vmatpush2.msra.mxu0 0.0
        %441 = vmatprep.subr.mxu0 0.0
        %442 = vmatpush2.msra.mxu0 0.0
        %443 = vmatprep.mubr.f32.mxu0 0.0
        %444 = vmatmul.mubr.f32.gmra.mxu0 %v377
        %v445 = vpop.f32.mrf.mxu0
        %v446 = vadd.f32 0.0, %v445
        %v447 = vpop.f32.mrf.mxu0
        %448 = vdwg.mxu0
        %vm449 = vcmp.ge.f32.partialorder %v446, 0.0
        %v450 = vmul.f32 %v446, 0.01
        %v451 = vsel %vm449, %v446, %v450
        %v452 = vsel %vm375, %v451, -inf
        %v453 = vrot.slane %v452, 4
        %v454 = vmax.f32 %v452, %v453
        %v455 = vrot.slane %v454, 2
        %v456 = vmax.f32 %v454, %v455
        %v457 = vrot.slane %v456, 1
        %v458 = vmax.f32 %v456, %v457
        %v460 = vsel %vm375, %v458, 0
        %462 = vmatprep.subr.mxu0 0.0
        %463 = vmatpush1.msra.mxu0 0.0
        %464 = vmatprep.subr.mxu0 0.0
        %465 = vmatpush1.msra.mxu0 0.0
        %466 = vmatprep.subr.mxu0 0.0
        %467 = vmatpush1.msra.mxu0 0.0
        %468 = vmatprep.subr.mxu0 0.0
        %469 = vmatpush1.msra.mxu0 0.0
        %470 = vmatprep.subr.mxu0 0.0
        %471 = vmatpush1.msra.mxu0 0.0
        %472 = vmatprep.subr.mxu0 0.0
        %473 = vmatpush1.msra.mxu0 0.0
        %474 = vmatprep.subr.mxu0 0.0
        %475 = vmatpush1.msra.mxu0 0.0
        %476 = vmatprep.subr.mxu0 0.0
        %477 = vmatpush1.msra.mxu0 0.0
        %478 = vmatprep.subr.mxu0 0.0
        %479 = vmatpush1.msra.mxu0 0.0
        %480 = vmatprep.subr.mxu0 0.0
        %481 = vmatpush1.msra.mxu0 0.0
        %482 = vmatprep.subr.mxu0 0.0
        %483 = vmatpush1.msra.mxu0 0.0
        %484 = vmatprep.subr.mxu0 0.0
        %485 = vmatpush1.msra.mxu0 0.0
        %486 = vmatprep.subr.mxu0 0.0
        %487 = vmatpush1.msra.mxu0 %v369
        %488 = vmatprep.subr.mxu0 0.0
        %489 = vmatpush1.msra.mxu0 %v368
        %490 = vmatprep.subr.mxu0 0.0
        %491 = vmatpush1.msra.mxu0 %v367
        %492 = vmatprep.subr.mxu0 0.0
        %493 = vmatpush1.msra.mxu0 %v366
        %494 = vmatprep.subr.mxu0 0.0
        %495 = vmatpush2.msra.mxu0 0.0
        %496 = vmatprep.subr.mxu0 0.0
        %497 = vmatpush2.msra.mxu0 0.0
        %498 = vmatprep.subr.mxu0 0.0
        %499 = vmatpush2.msra.mxu0 0.0
        %500 = vmatprep.subr.mxu0 0.0
        %501 = vmatpush2.msra.mxu0 0.0
        %502 = vmatprep.subr.mxu0 0.0
        %503 = vmatpush2.msra.mxu0 0.0
        %504 = vmatprep.subr.mxu0 0.0
        %505 = vmatpush2.msra.mxu0 0.0
        %506 = vmatprep.subr.mxu0 0.0
        %507 = vmatpush2.msra.mxu0 0.0
        %508 = vmatprep.subr.mxu0 0.0
        %509 = vmatpush2.msra.mxu0 0.0
        %510 = vmatprep.subr.mxu0 0.0
        %511 = vmatpush2.msra.mxu0 0.0
        %512 = vmatprep.subr.mxu0 0.0
        %513 = vmatpush2.msra.mxu0 0.0
        %514 = vmatprep.subr.mxu0 0.0
        %515 = vmatpush2.msra.mxu0 0.0
        %516 = vmatprep.subr.mxu0 0.0
        %517 = vmatpush2.msra.mxu0 0.0
        %518 = vmatprep.subr.mxu0 0.0
        %519 = vmatpush2.msra.mxu0 0.0
        %520 = vmatprep.subr.mxu0 0.0
        %521 = vmatpush2.msra.mxu0 0.0
        %522 = vmatprep.subr.mxu0 0.0
        %523 = vmatpush2.msra.mxu0 0.0
        %524 = vmatprep.subr.mxu0 0.0
        %525 = vmatpush2.msra.mxu0 0.0
        %526 = vmatprep.mubr.f32.mxu0 0.0
        %527 = vmatmul.mubr.f32.gmra.mxu0 %v460
        %v528 = vpop.f32.mrf.mxu0
        %v529 = vadd.f32 0.0, %v528
        %v530 = vpop.f32.mrf.mxu0
        %531 = vdwg.mxu0
        %vm532 = vcmp.ge.f32.partialorder %v529, 0.0
        %v533 = vmul.f32 %v529, 0.01
        %v534 = vsel %vm532, %v529, %v533
        %v535 = vld [vmem:[%s312] sm:$0xff]
        %v537 = vsel %vm375, %v535, 0
        %539 = vmatprep.subr.mxu0 0.0
        %540 = vmatpush1.msra.mxu0 0.0
        %541 = vmatprep.subr.mxu0 0.0
        %542 = vmatpush1.msra.mxu0 0.0
        %543 = vmatprep.subr.mxu0 0.0
        %544 = vmatpush1.msra.mxu0 0.0
        %545 = vmatprep.subr.mxu0 0.0
        %546 = vmatpush1.msra.mxu0 0.0
        %547 = vmatprep.subr.mxu0 0.0
        %548 = vmatpush1.msra.mxu0 0.0
        %549 = vmatprep.subr.mxu0 0.0
        %550 = vmatpush1.msra.mxu0 0.0
        %551 = vmatprep.subr.mxu0 0.0
        %552 = vmatpush1.msra.mxu0 0.0
        %553 = vmatprep.subr.mxu0 0.0
        %554 = vmatpush1.msra.mxu0 0.0
        %555 = vmatprep.subr.mxu0 0.0
        %556 = vmatpush1.msra.mxu0 0.0
        %557 = vmatprep.subr.mxu0 0.0
        %558 = vmatpush1.msra.mxu0 0.0
        %559 = vmatprep.subr.mxu0 0.0
        %560 = vmatpush1.msra.mxu0 0.0
        %561 = vmatprep.subr.mxu0 0.0
        %562 = vmatpush1.msra.mxu0 0.0
        %563 = vmatprep.subr.mxu0 0.0
        %564 = vmatpush1.msra.mxu0 %v365
        %565 = vmatprep.subr.mxu0 0.0
        %566 = vmatpush1.msra.mxu0 %v364
        %567 = vmatprep.subr.mxu0 0.0
        %568 = vmatpush1.msra.mxu0 %v363
        %569 = vmatprep.subr.mxu0 0.0
        %570 = vmatpush1.msra.mxu0 %v362
        %571 = vmatprep.subr.mxu0 0.0
        %572 = vmatpush2.msra.mxu0 0.0
        %573 = vmatprep.subr.mxu0 0.0
        %574 = vmatpush2.msra.mxu0 0.0
        %575 = vmatprep.subr.mxu0 0.0
        %576 = vmatpush2.msra.mxu0 0.0
        %577 = vmatprep.subr.mxu0 0.0
        %578 = vmatpush2.msra.mxu0 0.0
        %579 = vmatprep.subr.mxu0 0.0
        %580 = vmatpush2.msra.mxu0 0.0
        %581 = vmatprep.subr.mxu0 0.0
        %582 = vmatpush2.msra.mxu0 0.0
        %583 = vmatprep.subr.mxu0 0.0
        %584 = vmatpush2.msra.mxu0 0.0
        %585 = vmatprep.subr.mxu0 0.0
        %586 = vmatpush2.msra.mxu0 0.0
        %587 = vmatprep.subr.mxu0 0.0
        %588 = vmatpush2.msra.mxu0 0.0
        %589 = vmatprep.subr.mxu0 0.0
        %590 = vmatpush2.msra.mxu0 0.0
        %591 = vmatprep.subr.mxu0 0.0
        %592 = vmatpush2.msra.mxu0 0.0
        %593 = vmatprep.subr.mxu0 0.0
        %594 = vmatpush2.msra.mxu0 0.0
        %595 = vmatprep.subr.mxu0 0.0
        %596 = vmatpush2.msra.mxu0 0.0
        %597 = vmatprep.subr.mxu0 0.0
        %598 = vmatpush2.msra.mxu0 0.0
        %599 = vmatprep.subr.mxu0 0.0
        %600 = vmatpush2.msra.mxu0 0.0
        %601 = vmatprep.subr.mxu0 0.0
        %602 = vmatpush2.msra.mxu0 0.0
        %603 = vmatprep.mubr.f32.mxu0 0.0
        %604 = vmatmul.mubr.f32.gmra.mxu0 %v537
        %v605 = vpop.f32.mrf.mxu0
        %v606 = vadd.f32 0.0, %v605
        %v607 = vpop.f32.mrf.mxu0
        %608 = vdwg.mxu0
        %vm609 = vcmp.ge.f32.partialorder %v606, 0.0
        %v610 = vmul.f32 %v606, 0.01
        %v611 = vsel %vm609, %v606, %v610
        %v612 = vsel %vm375, %v611, -inf
        %v613 = vrot.slane %v612, 4
        %v614 = vmax.f32 %v612, %v613
        %v615 = vrot.slane %v614, 2
        %v616 = vmax.f32 %v614, %v615
        %v617 = vrot.slane %v616, 1
        %v618 = vmax.f32 %v616, %v617
        %v620 = vsel %vm375, %v618, 0
        %622 = vmatprep.subr.mxu0 0.0
        %623 = vmatpush1.msra.mxu0 0.0
        %624 = vmatprep.subr.mxu0 0.0
        %625 = vmatpush1.msra.mxu0 0.0
        %626 = vmatprep.subr.mxu0 0.0
        %627 = vmatpush1.msra.mxu0 0.0
        %628 = vmatprep.subr.mxu0 0.0
        %629 = vmatpush1.msra.mxu0 0.0
        %630 = vmatprep.subr.mxu0 0.0
        %631 = vmatpush1.msra.mxu0 0.0
        %632 = vmatprep.subr.mxu0 0.0
        %633 = vmatpush1.msra.mxu0 0.0
        %634 = vmatprep.subr.mxu0 0.0
        %635 = vmatpush1.msra.mxu0 0.0
        %636 = vmatprep.subr.mxu0 0.0
        %637 = vmatpush1.msra.mxu0 0.0
        %638 = vmatprep.subr.mxu0 0.0
        %639 = vmatpush1.msra.mxu0 0.0
        %640 = vmatprep.subr.mxu0 0.0
        %641 = vmatpush1.msra.mxu0 0.0
        %642 = vmatprep.subr.mxu0 0.0
        %643 = vmatpush1.msra.mxu0 0.0
        %644 = vmatprep.subr.mxu0 0.0
        %645 = vmatpush1.msra.mxu0 0.0
        %646 = vmatprep.subr.mxu0 0.0
        %647 = vmatpush1.msra.mxu0 %v369
        %648 = vmatprep.subr.mxu0 0.0
        %649 = vmatpush1.msra.mxu0 %v368
        %650 = vmatprep.subr.mxu0 0.0
        %651 = vmatpush1.msra.mxu0 %v367
        %652 = vmatprep.subr.mxu0 0.0
        %653 = vmatpush1.msra.mxu0 %v366
        %654 = vmatprep.subr.mxu0 0.0
        %655 = vmatpush2.msra.mxu0 0.0
        %656 = vmatprep.subr.mxu0 0.0
        %657 = vmatpush2.msra.mxu0 0.0
        %658 = vmatprep.subr.mxu0 0.0
        %659 = vmatpush2.msra.mxu0 0.0
        %660 = vmatprep.subr.mxu0 0.0
        %661 = vmatpush2.msra.mxu0 0.0
        %662 = vmatprep.subr.mxu0 0.0
        %663 = vmatpush2.msra.mxu0 0.0
        %664 = vmatprep.subr.mxu0 0.0
        %665 = vmatpush2.msra.mxu0 0.0
        %666 = vmatprep.subr.mxu0 0.0
        %667 = vmatpush2.msra.mxu0 0.0
        %668 = vmatprep.subr.mxu0 0.0
        %669 = vmatpush2.msra.mxu0 0.0
        %670 = vmatprep.subr.mxu0 0.0
        %671 = vmatpush2.msra.mxu0 0.0
        %672 = vmatprep.subr.mxu0 0.0
        %673 = vmatpush2.msra.mxu0 0.0
        %674 = vmatprep.subr.mxu0 0.0
        %675 = vmatpush2.msra.mxu0 0.0
        %676 = vmatprep.subr.mxu0 0.0
        %677 = vmatpush2.msra.mxu0 0.0
        %678 = vmatprep.subr.mxu0 0.0
        %679 = vmatpush2.msra.mxu0 0.0
        %680 = vmatprep.subr.mxu0 0.0
        %681 = vmatpush2.msra.mxu0 0.0
        %682 = vmatprep.subr.mxu0 0.0
        %683 = vmatpush2.msra.mxu0 0.0
        %684 = vmatprep.subr.mxu0 0.0
        %685 = vmatpush2.msra.mxu0 0.0
        %686 = vmatprep.mubr.f32.mxu0 0.0
        %687 = vmatmul.mubr.f32.gmra.mxu0 %v620
        %v688 = vpop.f32.mrf.mxu0
        %v689 = vadd.f32 0.0, %v688
        %v690 = vpop.f32.mrf.mxu0
        %691 = vdwg.mxu0
        %vm692 = vcmp.ge.f32.partialorder %v689, 0.0
        %v693 = vmul.f32 %v689, 0.01
        %v694 = vsel %vm692, %v689, %v693
        %v695 = vadd.f32 %v534, %v694
        %v696 = vmul.f32 %v695, 0.5
        %v698 = vsel %vm375, %v696, 0
        %700 = vmatprep.subr.mxu0 0.0
        %701 = vmatpush1.msra.mxu0 0.0
        %702 = vmatprep.subr.mxu0 0.0
        %703 = vmatpush1.msra.mxu0 0.0
        %704 = vmatprep.subr.mxu0 0.0
        %705 = vmatpush1.msra.mxu0 0.0
        %706 = vmatprep.subr.mxu0 0.0
        %707 = vmatpush1.msra.mxu0 0.0
        %708 = vmatprep.subr.mxu0 0.0
        %709 = vmatpush1.msra.mxu0 0.0
        %710 = vmatprep.subr.mxu0 0.0
        %711 = vmatpush1.msra.mxu0 0.0
        %712 = vmatprep.subr.mxu0 0.0
        %713 = vmatpush1.msra.mxu0 0.0
        %714 = vmatprep.subr.mxu0 0.0
        %715 = vmatpush1.msra.mxu0 0.0
        %716 = vmatprep.subr.mxu0 0.0
        %717 = vmatpush1.msra.mxu0 0.0
        %718 = vmatprep.subr.mxu0 0.0
        %719 = vmatpush1.msra.mxu0 0.0
        %720 = vmatprep.subr.mxu0 0.0
        %721 = vmatpush1.msra.mxu0 0.0
        %722 = vmatprep.subr.mxu0 0.0
        %723 = vmatpush1.msra.mxu0 0.0
        %724 = vmatprep.subr.mxu0 0.0
        %725 = vmatpush1.msra.mxu0 %v373
        %726 = vmatprep.subr.mxu0 0.0
        %727 = vmatpush1.msra.mxu0 %v372
        %728 = vmatprep.subr.mxu0 0.0
        %729 = vmatpush1.msra.mxu0 %v371
        %730 = vmatprep.subr.mxu0 0.0
        %731 = vmatpush1.msra.mxu0 %v370
        %732 = vmatprep.subr.mxu0 0.0
        %733 = vmatpush2.msra.mxu0 0.0
        %734 = vmatprep.subr.mxu0 0.0
        %735 = vmatpush2.msra.mxu0 0.0
        %736 = vmatprep.subr.mxu0 0.0
        %737 = vmatpush2.msra.mxu0 0.0
        %738 = vmatprep.subr.mxu0 0.0
        %739 = vmatpush2.msra.mxu0 0.0
        %740 = vmatprep.subr.mxu0 0.0
        %741 = vmatpush2.msra.mxu0 0.0
        %742 = vmatprep.subr.mxu0 0.0
        %743 = vmatpush2.msra.mxu0 0.0
        %744 = vmatprep.subr.mxu0 0.0
        %745 = vmatpush2.msra.mxu0 0.0
        %746 = vmatprep.subr.mxu0 0.0
        %747 = vmatpush2.msra.mxu0 0.0
        %748 = vmatprep.subr.mxu0 0.0
        %749 = vmatpush2.msra.mxu0 0.0
        %750 = vmatprep.subr.mxu0 0.0
        %751 = vmatpush2.msra.mxu0 0.0
        %752 = vmatprep.subr.mxu0 0.0
        %753 = vmatpush2.msra.mxu0 0.0
        %754 = vmatprep.subr.mxu0 0.0
        %755 = vmatpush2.msra.mxu0 0.0
        %756 = vmatprep.subr.mxu0 0.0
        %757 = vmatpush2.msra.mxu0 0.0
        %758 = vmatprep.subr.mxu0 0.0
        %759 = vmatpush2.msra.mxu0 0.0
        %760 = vmatprep.subr.mxu0 0.0
        %761 = vmatpush2.msra.mxu0 0.0
        %762 = vmatprep.subr.mxu0 0.0
        %763 = vmatpush2.msra.mxu0 0.0
        %764 = vmatprep.mubr.f32.mxu0 0.0
        %765 = vmatmul.mubr.f32.gmra.mxu0 %v698
        %v766 = vpop.f32.mrf.mxu0
        %v767 = vadd.f32 0.0, %v766
        %v768 = vpop.f32.mrf.mxu0
        %769 = vdwg.mxu0
        %vm770 = vcmp.ge.f32.partialorder %v767, 0.0
        %v771 = vmul.f32 %v767, 0.01
        %v772 = vsel %vm770, %v767, %v771
        %v773 = vld [vmem:[#allocation11] sm:$0xff]
        %v774 = vld [vmem:[#allocation11 + $0x8] sm:$0xff]
        %v775 = vld [vmem:[#allocation11 + $0x10] sm:$0xff]
        %v776 = vld [vmem:[#allocation11 + $0x18] sm:$0xff]
        %v778 = vsel %vm375, %v772, 0
        %780 = vmatprep.subr.mxu0 0.0
        %781 = vmatpush1.msra.mxu0 0.0
        %782 = vmatprep.subr.mxu0 0.0
        %783 = vmatpush1.msra.mxu0 0.0
        %784 = vmatprep.subr.mxu0 0.0
        %785 = vmatpush1.msra.mxu0 0.0
        %786 = vmatprep.subr.mxu0 0.0
        %787 = vmatpush1.msra.mxu0 0.0
        %788 = vmatprep.subr.mxu0 0.0
        %789 = vmatpush1.msra.mxu0 0.0
        %790 = vmatprep.subr.mxu0 0.0
        %791 = vmatpush1.msra.mxu0 0.0
        %792 = vmatprep.subr.mxu0 0.0
        %793 = vmatpush1.msra.mxu0 0.0
        %794 = vmatprep.subr.mxu0 0.0
        %795 = vmatpush1.msra.mxu0 0.0
        %796 = vmatprep.subr.mxu0 0.0
        %797 = vmatpush1.msra.mxu0 0.0
        %798 = vmatprep.subr.mxu0 0.0
        %799 = vmatpush1.msra.mxu0 0.0
        %800 = vmatprep.subr.mxu0 0.0
        %801 = vmatpush1.msra.mxu0 0.0
        %802 = vmatprep.subr.mxu0 0.0
        %803 = vmatpush1.msra.mxu0 0.0
        %804 = vmatprep.subr.mxu0 0.0
        %805 = vmatpush1.msra.mxu0 %v776
        %806 = vmatprep.subr.mxu0 0.0
        %807 = vmatpush1.msra.mxu0 %v775
        %808 = vmatprep.subr.mxu0 0.0
        %809 = vmatpush1.msra.mxu0 %v774
        %810 = vmatprep.subr.mxu0 0.0
        %811 = vmatpush1.msra.mxu0 %v773
        %812 = vmatprep.subr.mxu0 0.0
        %813 = vmatpush2.msra.mxu0 0.0
        %814 = vmatprep.subr.mxu0 0.0
        %815 = vmatpush2.msra.mxu0 0.0
        %816 = vmatprep.subr.mxu0 0.0
        %817 = vmatpush2.msra.mxu0 0.0
        %818 = vmatprep.subr.mxu0 0.0
        %819 = vmatpush2.msra.mxu0 0.0
        %820 = vmatprep.subr.mxu0 0.0
        %821 = vmatpush2.msra.mxu0 0.0
        %822 = vmatprep.subr.mxu0 0.0
        %823 = vmatpush2.msra.mxu0 0.0
        %824 = vmatprep.subr.mxu0 0.0
        %825 = vmatpush2.msra.mxu0 0.0
        %826 = vmatprep.subr.mxu0 0.0
        %827 = vmatpush2.msra.mxu0 0.0
        %828 = vmatprep.subr.mxu0 0.0
        %829 = vmatpush2.msra.mxu0 0.0
        %830 = vmatprep.subr.mxu0 0.0
        %831 = vmatpush2.msra.mxu0 0.0
        %832 = vmatprep.subr.mxu0 0.0
        %833 = vmatpush2.msra.mxu0 0.0
        %834 = vmatprep.subr.mxu0 0.0
        %835 = vmatpush2.msra.mxu0 0.0
        %836 = vmatprep.subr.mxu0 0.0
        %837 = vmatpush2.msra.mxu0 0.0
        %838 = vmatprep.subr.mxu0 0.0
        %839 = vmatpush2.msra.mxu0 0.0
        %840 = vmatprep.subr.mxu0 0.0
        %841 = vmatpush2.msra.mxu0 0.0
        %842 = vmatprep.subr.mxu0 0.0
        %843 = vmatpush2.msra.mxu0 0.0
        %844 = vmatprep.mubr.f32.mxu0 0.0
        %845 = vmatmul.mubr.f32.gmra.mxu0 %v778
        %v846 = vpop.f32.mrf.mxu0
        %v847 = vadd.f32 0.0, %v846
        %v848 = vpop.f32.mrf.mxu0
        %849 = vdwg.mxu0
        %s850 = scalar_lea.vmem [#allocation11], 32
        %v851 = vld [vmem:[%s850] sm:$0xff]
        %v852 = vld [vmem:[%s850 + $0x8] sm:$0xff]
        %v853 = vld [vmem:[%s850 + $0x10] sm:$0xff]
        %v854 = vld [vmem:[%s850 + $0x18] sm:$0xff]
        %855 = vmatprep.subr.mxu0 0.0
        %856 = vmatpush1.msra.mxu0 0.0
        %857 = vmatprep.subr.mxu0 0.0
        %858 = vmatpush1.msra.mxu0 0.0
        %859 = vmatprep.subr.mxu0 0.0
        %860 = vmatpush1.msra.mxu0 0.0
        %861 = vmatprep.subr.mxu0 0.0
        %862 = vmatpush1.msra.mxu0 0.0
        %863 = vmatprep.subr.mxu0 0.0
        %864 = vmatpush1.msra.mxu0 0.0
        %865 = vmatprep.subr.mxu0 0.0
        %866 = vmatpush1.msra.mxu0 0.0
        %867 = vmatprep.subr.mxu0 0.0
        %868 = vmatpush1.msra.mxu0 0.0
        %869 = vmatprep.subr.mxu0 0.0
        %870 = vmatpush1.msra.mxu0 0.0
        %871 = vmatprep.subr.mxu0 0.0
        %872 = vmatpush1.msra.mxu0 0.0
        %873 = vmatprep.subr.mxu0 0.0
        %874 = vmatpush1.msra.mxu0 0.0
        %875 = vmatprep.subr.mxu0 0.0
        %876 = vmatpush1.msra.mxu0 0.0
        %877 = vmatprep.subr.mxu0 0.0
        %878 = vmatpush1.msra.mxu0 0.0
        %879 = vmatprep.subr.mxu0 0.0
        %880 = vmatpush1.msra.mxu0 %v854
        %881 = vmatprep.subr.mxu0 0.0
        %882 = vmatpush1.msra.mxu0 %v853
        %883 = vmatprep.subr.mxu0 0.0
        %884 = vmatpush1.msra.mxu0 %v852
        %885 = vmatprep.subr.mxu0 0.0
        %886 = vmatpush1.msra.mxu0 %v851
        %887 = vmatprep.subr.mxu0 0.0
        %888 = vmatpush2.msra.mxu0 0.0
        %889 = vmatprep.subr.mxu0 0.0
        %890 = vmatpush2.msra.mxu0 0.0
        %891 = vmatprep.subr.mxu0 0.0
        %892 = vmatpush2.msra.mxu0 0.0
        %893 = vmatprep.subr.mxu0 0.0
        %894 = vmatpush2.msra.mxu0 0.0
        %895 = vmatprep.subr.mxu0 0.0
        %896 = vmatpush2.msra.mxu0 0.0
        %897 = vmatprep.subr.mxu0 0.0
        %898 = vmatpush2.msra.mxu0 0.0
        %899 = vmatprep.subr.mxu0 0.0
        %900 = vmatpush2.msra.mxu0 0.0
        %901 = vmatprep.subr.mxu0 0.0
        %902 = vmatpush2.msra.mxu0 0.0
        %903 = vmatprep.subr.mxu0 0.0
        %904 = vmatpush2.msra.mxu0 0.0
        %905 = vmatprep.subr.mxu0 0.0
        %906 = vmatpush2.msra.mxu0 0.0
        %907 = vmatprep.subr.mxu0 0.0
        %908 = vmatpush2.msra.mxu0 0.0
        %909 = vmatprep.subr.mxu0 0.0
        %910 = vmatpush2.msra.mxu0 0.0
        %911 = vmatprep.subr.mxu0 0.0
        %912 = vmatpush2.msra.mxu0 0.0
        %913 = vmatprep.subr.mxu0 0.0
        %914 = vmatpush2.msra.mxu0 0.0
        %915 = vmatprep.subr.mxu0 0.0
        %916 = vmatpush2.msra.mxu0 0.0
        %917 = vmatprep.subr.mxu0 0.0
        %918 = vmatpush2.msra.mxu0 0.0
        %919 = vmatprep.mubr.f32.mxu0 0.0
        %920 = vmatmul.mubr.f32.gmra.mxu0 %v778
        %v921 = vpop.f32.mrf.mxu0
        %v922 = vadd.f32 0.0, %v921
        %v923 = vpop.f32.mrf.mxu0
        %924 = vdwg.mxu0
        %s925 = scalar_lea.vmem [#allocation11], 64
        %v926 = vld [vmem:[%s925] sm:$0xff]
        %v927 = vld [vmem:[%s925 + $0x8] sm:$0xff]
        %v928 = vld [vmem:[%s925 + $0x10] sm:$0xff]
        %v929 = vld [vmem:[%s925 + $0x18] sm:$0xff]
        %930 = vmatprep.subr.mxu0 0.0
        %931 = vmatpush1.msra.mxu0 0.0
        %932 = vmatprep.subr.mxu0 0.0
        %933 = vmatpush1.msra.mxu0 0.0
        %934 = vmatprep.subr.mxu0 0.0
        %935 = vmatpush1.msra.mxu0 0.0
        %936 = vmatprep.subr.mxu0 0.0
        %937 = vmatpush1.msra.mxu0 0.0
        %938 = vmatprep.subr.mxu0 0.0
        %939 = vmatpush1.msra.mxu0 0.0
        %940 = vmatprep.subr.mxu0 0.0
        %941 = vmatpush1.msra.mxu0 0.0
        %942 = vmatprep.subr.mxu0 0.0
        %943 = vmatpush1.msra.mxu0 0.0
        %944 = vmatprep.subr.mxu0 0.0
        %945 = vmatpush1.msra.mxu0 0.0
        %946 = vmatprep.subr.mxu0 0.0
        %947 = vmatpush1.msra.mxu0 0.0
        %948 = vmatprep.subr.mxu0 0.0
        %949 = vmatpush1.msra.mxu0 0.0
        %950 = vmatprep.subr.mxu0 0.0
        %951 = vmatpush1.msra.mxu0 0.0
        %952 = vmatprep.subr.mxu0 0.0
        %953 = vmatpush1.msra.mxu0 0.0
        %954 = vmatprep.subr.mxu0 0.0
        %955 = vmatpush1.msra.mxu0 %v929
        %956 = vmatprep.subr.mxu0 0.0
        %957 = vmatpush1.msra.mxu0 %v928
        %958 = vmatprep.subr.mxu0 0.0
        %959 = vmatpush1.msra.mxu0 %v927
        %960 = vmatprep.subr.mxu0 0.0
        %961 = vmatpush1.msra.mxu0 %v926
        %962 = vmatprep.subr.mxu0 0.0
        %963 = vmatpush2.msra.mxu0 0.0
        %964 = vmatprep.subr.mxu0 0.0
        %965 = vmatpush2.msra.mxu0 0.0
        %966 = vmatprep.subr.mxu0 0.0
        %967 = vmatpush2.msra.mxu0 0.0
        %968 = vmatprep.subr.mxu0 0.0
        %969 = vmatpush2.msra.mxu0 0.0
        %970 = vmatprep.subr.mxu0 0.0
        %971 = vmatpush2.msra.mxu0 0.0
        %972 = vmatprep.subr.mxu0 0.0
        %973 = vmatpush2.msra.mxu0 0.0
        %974 = vmatprep.subr.mxu0 0.0
        %975 = vmatpush2.msra.mxu0 0.0
        %976 = vmatprep.subr.mxu0 0.0
        %977 = vmatpush2.msra.mxu0 0.0
        %978 = vmatprep.subr.mxu0 0.0
        %979 = vmatpush2.msra.mxu0 0.0
        %980 = vmatprep.subr.mxu0 0.0
        %981 = vmatpush2.msra.mxu0 0.0
        %982 = vmatprep.subr.mxu0 0.0
        %983 = vmatpush2.msra.mxu0 0.0
        %984 = vmatprep.subr.mxu0 0.0
        %985 = vmatpush2.msra.mxu0 0.0
        %986 = vmatprep.subr.mxu0 0.0
        %987 = vmatpush2.msra.mxu0 0.0
        %988 = vmatprep.subr.mxu0 0.0
        %989 = vmatpush2.msra.mxu0 0.0
        %990 = vmatprep.subr.mxu0 0.0
        %991 = vmatpush2.msra.mxu0 0.0
        %992 = vmatprep.subr.mxu0 0.0
        %993 = vmatpush2.msra.mxu0 0.0
        %994 = vmatprep.mubr.f32.mxu0 0.0
        %995 = vmatmul.mubr.f32.gmra.mxu0 %v778
        %v996 = vpop.f32.mrf.mxu0
        %v997 = vadd.f32 0.0, %v996
        %v998 = vpop.f32.mrf.mxu0
        %999 = vdwg.mxu0
        %s1000 = scalar_lea.vmem [#allocation11], 96
        %v1001 = vld [vmem:[%s1000] sm:$0xff]
        %v1002 = vld [vmem:[%s1000 + $0x8] sm:$0xff]
        %v1003 = vld [vmem:[%s1000 + $0x10] sm:$0xff]
        %v1004 = vld [vmem:[%s1000 + $0x18] sm:$0xff]
        %1005 = vmatprep.subr.mxu0 0.0
        %1006 = vmatpush1.msra.mxu0 0.0
        %1007 = vmatprep.subr.mxu0 0.0
        %1008 = vmatpush1.msra.mxu0 0.0
        %1009 = vmatprep.subr.mxu0 0.0
        %1010 = vmatpush1.msra.mxu0 0.0
        %1011 = vmatprep.subr.mxu0 0.0
        %1012 = vmatpush1.msra.mxu0 0.0
        %1013 = vmatprep.subr.mxu0 0.0
        %1014 = vmatpush1.msra.mxu0 0.0
        %1015 = vmatprep.subr.mxu0 0.0
        %1016 = vmatpush1.msra.mxu0 0.0
        %1017 = vmatprep.subr.mxu0 0.0
        %1018 = vmatpush1.msra.mxu0 0.0
        %1019 = vmatprep.subr.mxu0 0.0
        %1020 = vmatpush1.msra.mxu0 0.0
        %1021 = vmatprep.subr.mxu0 0.0
        %1022 = vmatpush1.msra.mxu0 0.0
        %1023 = vmatprep.subr.mxu0 0.0
        %1024 = vmatpush1.msra.mxu0 0.0
        %1025 = vmatprep.subr.mxu0 0.0
        %1026 = vmatpush1.msra.mxu0 0.0
        %1027 = vmatprep.subr.mxu0 0.0
        %1028 = vmatpush1.msra.mxu0 0.0
        %1029 = vmatprep.subr.mxu0 0.0
        %1030 = vmatpush1.msra.mxu0 %v1004
        %1031 = vmatprep.subr.mxu0 0.0
        %1032 = vmatpush1.msra.mxu0 %v1003
        %1033 = vmatprep.subr.mxu0 0.0
        %1034 = vmatpush1.msra.mxu0 %v1002
        %1035 = vmatprep.subr.mxu0 0.0
        %1036 = vmatpush1.msra.mxu0 %v1001
        %1037 = vmatprep.subr.mxu0 0.0
        %1038 = vmatpush2.msra.mxu0 0.0
        %1039 = vmatprep.subr.mxu0 0.0
        %1040 = vmatpush2.msra.mxu0 0.0
        %1041 = vmatprep.subr.mxu0 0.0
        %1042 = vmatpush2.msra.mxu0 0.0
        %1043 = vmatprep.subr.mxu0 0.0
        %1044 = vmatpush2.msra.mxu0 0.0
        %1045 = vmatprep.subr.mxu0 0.0
        %1046 = vmatpush2.msra.mxu0 0.0
        %1047 = vmatprep.subr.mxu0 0.0
        %1048 = vmatpush2.msra.mxu0 0.0
        %1049 = vmatprep.subr.mxu0 0.0
        %1050 = vmatpush2.msra.mxu0 0.0
        %1051 = vmatprep.subr.mxu0 0.0
        %1052 = vmatpush2.msra.mxu0 0.0
        %1053 = vmatprep.subr.mxu0 0.0
        %1054 = vmatpush2.msra.mxu0 0.0
        %1055 = vmatprep.subr.mxu0 0.0
        %1056 = vmatpush2.msra.mxu0 0.0
        %1057 = vmatprep.subr.mxu0 0.0
        %1058 = vmatpush2.msra.mxu0 0.0
        %1059 = vmatprep.subr.mxu0 0.0
        %1060 = vmatpush2.msra.mxu0 0.0
        %1061 = vmatprep.subr.mxu0 0.0
        %1062 = vmatpush2.msra.mxu0 0.0
        %1063 = vmatprep.subr.mxu0 0.0
        %1064 = vmatpush2.msra.mxu0 0.0
        %1065 = vmatprep.subr.mxu0 0.0
        %1066 = vmatpush2.msra.mxu0 0.0
        %1067 = vmatprep.subr.mxu0 0.0
        %1068 = vmatpush2.msra.mxu0 0.0
        %1069 = vmatprep.mubr.f32.mxu0 0.0
        %1070 = vmatmul.mubr.f32.gmra.mxu0 %v778
        %v1071 = vpop.f32.mrf.mxu0
        %v1072 = vadd.f32 0.0, %v1071
        %v1073 = vpop.f32.mrf.mxu0
        %1074 = vdwg.mxu0
        %v1076 = vrot.slane %v922, 7
        %v1079 = vrot.slane %v997, 6
        %v1082 = vrot.slane %v1072, 5
        %vm1084 = vcmask 1040384
        %v1085 = vsel %vm1084, %v847, %v1076
        %vm1086 = vcmask 1041408
        %v1087 = vsel %vm1086, %v1085, %v1079
        %vm1088 = vcmask 1042432
        %v1089 = vsel %vm1088, %v1087, %v1082
        %v1090 = vmul.f32 %v1089, %v1089
        %vm1091 = vcmask 257024
        %v1092 = vsel %vm1091, %v1090, 0.0
        %1093 = vadd.xlane.f32.xlu0 %v1092
        %v1094 = vpop.xlane.xlu0 %1093
        %v1095 = vrsqrt.pop %v1094
        %v1096 = vmul.f32 %v1089, %v1095
        %1097 = vst.msk [vmem:[%s361] sm:$0xf] %vm1091, %v1096
        %s1098 = sand.u32 %s172, 1
        %s1099 = scalar_lea.sflag [#allocation4], %s1098
        %s1100 = sand.u32 %s172, 1
        %s1101 = smul.addr %s1100, 4
        %s1102 = scalar_lea.vmem [#allocation13], %s1101
        // Predicated region
        $region69: #{tpu_custom_call.1} parent=43 // pred_check
          %p1103 = pneg %p182
        $region70: #{tpu_custom_call.1} parent=43 // pred_check_branch
          %1105 = sbr.rel (%p1103) target = $region72
        $region71: #{tpu_custom_call.1} parent=43 // pred_region
          %s1107 = ssub.s32 64, 64
          %1108 = vsyncadd %s1099, %s1107
          %s1109 = smul.addr %s28, 64
          %s1110 = scalar_lea.hbm %s6, %s1109
          %s1112 = sshll.u32 %s1102, 4
          %s1113 = int_to_ptr.vmem [resolvable:$true] %s1112
          %1115 = dma.vmem_to_hbm [thread:$0]  %s1113, 64, %s1110, %s1099
        $region72: #{tpu_custom_call.1} parent=43 // pred_fallthru
          _
      $region44: #{tpu_custom_call.1} parent=5 // pred_fallthru
        _
      %p1116 = scmp.le.s32.totalorder 2, %s23
      // Predicated region
      $region73: #{tpu_custom_call.1} parent=5 // pred_check
        %p1117 = pneg %p1116
      $region74: #{tpu_custom_call.1} parent=5 // pred_check_branch
        %1119 = sbr.rel (%p1117) target = $region76
      $region75: #{tpu_custom_call.1} parent=5 // pred_region
        %s1120 = ssub.s32 %s23, 2
        // Predicated region
        $region77: #{tpu_custom_call.1} parent=75 // pred_check
          %p1121 = pneg %p188
        $region78: #{tpu_custom_call.1} parent=75 // pred_check_branch
          %1123 = sbr.rel (%p1121) target = $region80
        $region79: #{tpu_custom_call.1} parent=75 // pred_region
          %s1124 = sand.u32 %s173, 1
          %s1125 = scalar_lea.sflag [#allocation4], %s1124
          %s1126 = sand.u32 %s173, 1
          %s1127 = smul.addr %s1126, 4
          %s1128 = scalar_lea.vmem [#allocation13], %s1127
          %1129 = dma.done %s1125, 64
        $region80: #{tpu_custom_call.1} parent=75 // pred_fallthru
          _
      $region76: #{tpu_custom_call.1} parent=5 // pred_fallthru
        _
    $region6: #{tpu_custom_call.1} parent=1 // loop_footer
      %s27 = sadd.s32 1, %s23
    $region7: #{tpu_custom_call.1} parent=1 // loop_footer_branch
      %22 = sbr.rel target = $region3
    $region8: #{tpu_custom_call.1} parent=1 // loop_exit
      _
    %1130 = vsyncpa [#allocation3], 1
    %s1131 = scalar_lea.sflag [#allocation3], 1
    %1132 = vsyncpa %s1131, 1
    %1133 = vsyncpa [#allocation6], 1
    %s1134 = scalar_lea.sflag [#allocation6], 1
    %1135 = vsyncpa %s1134, 1
    %1136 = vsyncpa [#allocation9], 1
    %1137 = vsyncpa [#allocation12], 1
    %1138 = vsyncpa [#allocation4], 1
    %s1139 = scalar_lea.sflag [#allocation4], 1
    %1140 = vsyncpa %s1139, 1

</llo_original>
